<compile_context>
chip_gen: v6e
topology: v6e:2x2x1
jax: 0.10.0
libtpu: 0.0.40
codegen_flags: <defaults>
</compile_context>

<pallas_src>
import functools

import jax
import jax.numpy as jnp
from jax.experimental import pallas as pl
from jax.experimental.pallas import tpu as pltpu


def _round_up(n: int, m: int) -> int:
    return ((n + m - 1) // m) * m


def _vmem_capacity_bytes() -> int:
    try:
        return int(pltpu.get_tpu_info().vmem_capacity_bytes)
    except Exception:
        return 64 * 1024 * 1024  # conservative (v7x per-TC capacity)


def _bf16_vpu_available() -> bool:
    # v6e / v7x have a bf16 VALU; older generations do elementwise work in f32.
    try:
        kind = jax.devices()[0].device_kind.lower()
        return any(tag in kind for tag in ("v6", "v7", "7x"))
    except Exception:
        return False


def _pick_block(total: int, target: int, quantum: int) -> int:
    """Largest multiple of `quantum` dividing `total`, at most `target`."""
    best = quantum
    cand = quantum
    while cand <= min(total, target):
        if total % cand == 0:
            best = cand
        cand += quantum
    return best


# --------------------------------------------------------------------------
# Kernel bodies
# --------------------------------------------------------------------------
def _ffn_kernel(x_ref, w1_ref, b1_ref, w2_ref, b2_ref, o_ref,
                *, compute_dtype, hidden_dtype):
    """Resident-weights path: whole W1/W2 live in VMEM, one M grid axis."""
    x = x_ref[...].astype(compute_dtype)
    h = jnp.dot(x, w1_ref[...], preferred_element_type=jnp.float32)
    # bias + ReLU in hidden_dtype (bf16 on v6e/v7x, f32 on v5e); accumulation
    # of both matmuls stays f32 via preferred_element_type.
    h = jnp.maximum(h.astype(hidden_dtype) + b1_ref[...], 0.0).astype(compute_dtype)
    y = jnp.dot(h, w2_ref[...], preferred_element_type=jnp.float32)
    y = jnp.maximum(y + b2_ref[...], 0.0)          # ReLU after final layer (per reference)
    # dropout p=0.0 -> identity.
    o_ref[...] = y.astype(o_ref.dtype)


def _ffn_stream_kernel(x_ref, w1_ref, b1_ref, w2_ref, b2_ref, o_ref, acc_ref,
                       *, compute_dtype, hidden_dtype):
    """F-streaming path: grid = (M tiles, F blocks); accumulate y in f32 scratch."""
    k = pl.program_id(1)

    @pl.when(k == 0)
    def _():
        acc_ref[...] = jnp.zeros_like(acc_ref)

    x = x_ref[...].astype(compute_dtype)
    h = jnp.dot(x, w1_ref[...], preferred_element_type=jnp.float32)
    h = jnp.maximum(h.astype(hidden_dtype) + b1_ref[...], 0.0).astype(compute_dtype)
    acc_ref[...] += jnp.dot(h, w2_ref[...], preferred_element_type=jnp.float32)

    @pl.when(k == pl.num_programs(1) - 1)
    def _():
        y = jnp.maximum(acc_ref[...] + b2_ref[...], 0.0)
        o_ref[...] = y.astype(o_ref.dtype)


# --------------------------------------------------------------------------
# Wrapper
# --------------------------------------------------------------------------
def positionwise_feed_forward(x, w1, b1, w2, b2, *, tm=512, tf=None,
                              compute_dtype=jnp.bfloat16, out_dtype=None,
                              force_stream=False):
    """x: [B, S, D_in] -> [B, S, D_out]. Weights stored (in_features, out_features).

    out_dtype defaults to x.dtype; pass jnp.bfloat16 to halve output writeback
    traffic when the downstream layer consumes bf16 anyway.
    """
    B, S, D_in = x.shape
    F = w1.shape[1]
    D_out = w2.shape[1]
    out_dtype = x.dtype if out_dtype is None else out_dtype
    M = B * S

    cd = jnp.dtype(compute_dtype)
    hidden_dtype = (compute_dtype
                    if (_bf16_vpu_available() and cd == jnp.dtype(jnp.bfloat16))
                    else jnp.float32)

    # --- lane-dense feature padding (multiples of 128) -----------------------
    D_in_p = _round_up(D_in, 128)
    F_p = _round_up(F, 128)
    D_out_p = _round_up(D_out, 128)

    # --- token tile: multiple of 16 (bf16 sublane packing); prefer divisor of M
    tm = max(16, _round_up(tm, 16))
    tm_eff = min(tm, _round_up(M, 16))
    if M % tm_eff != 0:
        for cand in range(tm_eff, 127, -16):
            if M % cand == 0:
                tm_eff = cand
                break
    M_p = _round_up(M, tm_eff)

    # --- pad only when needed; x keeps its native dtype (cast inside kernel) --
    x2d = x.reshape(M, D_in)
    if (M_p, D_in_p) != (M, D_in):
        x2d = jnp.pad(x2d, ((0, M_p - M), (0, D_in_p - D_in)))
    w1_p = w1 if (D_in_p, F_p) == (D_in, F) else \
        jnp.pad(w1, ((0, D_in_p - D_in), (0, F_p - F)))
    w2_p = w2 if (F_p, D_out_p) == (F, D_out) else \
        jnp.pad(w2, ((0, F_p - F), (0, D_out_p - D_out)))
    w1_p = w1_p.astype(compute_dtype)
    w2_p = w2_p.astype(compute_dtype)
    b1_p = jnp.pad(b1, (0, F_p - F)).astype(hidden_dtype).reshape(1, F_p)
    b2_p = jnp.pad(b2, (0, D_out_p - D_out)).astype(jnp.float32).reshape(1, D_out_p)

    x_bytes = jnp.dtype(x2d.dtype).itemsize
    out_bytes = jnp.dtype(out_dtype).itemsize
    h_bytes = jnp.dtype(hidden_dtype).itemsize
    vmem_cap = _vmem_capacity_bytes()

    resident_w_bytes = ((D_in_p * F_p + F_p * D_out_p) * cd.itemsize
                        + F_p * h_bytes + D_out_p * 4)
    use_stream = force_stream or (resident_w_bytes > int(0.4 * vmem_cap))

    cost = pl.CostEstimate(
        flops=2 * M * (D_in * F + F * D_out) + 2 * M * (F + D_out),
        transcendentals=0,
        bytes_accessed=(M * D_in * x_bytes
                        + (D_in * F + F * D_out) * cd.itemsize
                        + (F + D_out) * 4
                        + M * D_out * out_bytes),
    )

    if not use_stream:
        # ---------------- resident-weights path ------------------------------
        est = (resident_w_bytes                          # single-buffered weights
               + 2 * tm_eff * D_in_p * x_bytes           # x tile (double-buffered)
               + 2 * tm_eff * D_out_p * out_bytes        # out tile (double-buffered)
               + tm_eff * F_p * (4 + cd.itemsize)        # f32 h + compute-dtype copy
               + tm_eff * D_out_p * 4                    # f32 y
               + (4 << 20))                              # compiler scratch headroom
        vmem_limit = int(min(0.85 * vmem_cap, max(32 << 20, est * 1.3)))

        out2d = pl.pallas_call(
            functools.partial(_ffn_kernel, compute_dtype=compute_dtype,
                              hidden_dtype=hidden_dtype),
            out_shape=jax.ShapeDtypeStruct((M_p, D_out_p), out_dtype),
            grid_spec=pltpu.PrefetchScalarGridSpec(
                num_scalar_prefetch=0,
                grid=(M_p // tm_eff,),
                in_specs=[
                    pl.BlockSpec((tm_eff, D_in_p), lambda i: (i, 0)),
                    # constant index_map -> single-buffer the resident operands
                    pl.BlockSpec((D_in_p, F_p), lambda i: (0, 0),
                                 pipeline_mode=pl.Buffered(1)),
                    pl.BlockSpec((1, F_p), lambda i: (0, 0),
                                 pipeline_mode=pl.Buffered(1)),
                    pl.BlockSpec((F_p, D_out_p), lambda i: (0, 0),
                                 pipeline_mode=pl.Buffered(1)),
                    pl.BlockSpec((1, D_out_p), lambda i: (0, 0),
                                 pipeline_mode=pl.Buffered(1)),
                ],
                out_specs=pl.BlockSpec((tm_eff, D_out_p), lambda i: (i, 0)),
            ),
            compiler_params=pltpu.CompilerParams(
                dimension_semantics=("parallel",),
                vmem_limit_bytes=vmem_limit,
            ),
            cost_estimate=cost,
        )(x2d, w1_p, b1_p, w2_p, b2_p)
    else:
        # ---------------- F-streaming path (large d_ff / small VMEM) ---------
        if tf is not None and F_p % tf == 0:
            tf_eff = tf
        else:
            tf_eff = _pick_block(F_p, 1024, 128)
        est = (2 * (D_in_p * tf_eff + tf_eff * D_out_p) * cd.itemsize  # W1/W2 blocks
               + 2 * tf_eff * h_bytes + D_out_p * 4                    # biases
               + 2 * tm_eff * D_in_p * x_bytes                         # x tile
               + 2 * tm_eff * D_out_p * out_bytes                      # out tile
               + tm_eff * D_out_p * 4                                  # acc scratch
               + tm_eff * tf_eff * (4 + cd.itemsize)                   # h intermediates
               + (4 << 20))
        vmem_limit = int(min(0.85 * vmem_cap, max(32 << 20, est * 1.3)))

        out2d = pl.pallas_call(
            functools.partial(_ffn_stream_kernel, compute_dtype=compute_dtype,
                              hidden_dtype=hidden_dtype),
            out_shape=jax.ShapeDtypeStruct((M_p, D_out_p), out_dtype),
            grid_spec=pltpu.PrefetchScalarGridSpec(
                num_scalar_prefetch=0,
                grid=(M_p // tm_eff, F_p // tf_eff),
                in_specs=[
                    pl.BlockSpec((tm_eff, D_in_p), lambda i, k: (i, 0)),
                    pl.BlockSpec((D_in_p, tf_eff), lambda i, k: (0, k)),
                    pl.BlockSpec((1, tf_eff), lambda i, k: (0, k)),
                    pl.BlockSpec((tf_eff, D_out_p), lambda i, k: (k, 0)),
                    pl.BlockSpec((1, D_out_p), lambda i, k: (0, 0),
                                 pipeline_mode=pl.Buffered(1)),
                ],
                out_specs=pl.BlockSpec((tm_eff, D_out_p), lambda i, k: (i, 0)),
                scratch_shapes=[pltpu.VMEM((tm_eff, D_out_p), jnp.float32)],
            ),
            compiler_params=pltpu.CompilerParams(
                dimension_semantics=("parallel", "arbitrary"),
                vmem_limit_bytes=vmem_limit,
            ),
            cost_estimate=cost,
        )(x2d, w1_p, b1_p, w2_p, b2_p)

    if (M_p, D_out_p) != (M, D_out):
        out2d = out2d[:M, :D_out]
    return out2d.reshape(B, S, D_out)


def reference(x, w1, b1, w2, b2):
    h = jnp.maximum(x @ w1 + b1, 0.0)
    y = jnp.maximum(h @ w2 + b2, 0.0)
    return y


if __name__ == "__main__":
    # Small shapes consistent with the module: [batch, seq, input_depth]
    B, S = 2, 8
    input_depth, filter_size, output_depth = 32, 64, 32

    key = jax.random.PRNGKey(0)
    kx, k1, k2, k3, k4 = jax.random.split(key, 5)

    x = jax.random.normal(kx, (B, S, input_depth), dtype=jnp.float32)
    # Deterministic synthetic parameters (stored as (in, out) for x @ W).
    w1 = jax.random.normal(k1, (input_depth, filter_size), dtype=jnp.float32) * 0.05
    b1 = jax.random.normal(k2, (filter_size,), dtype=jnp.float32) * 0.05
    w2 = jax.random.normal(k3, (filter_size, output_depth), dtype=jnp.float32) * 0.05
    b2 = jax.random.normal(k4, (output_depth,), dtype=jnp.float32) * 0.05

    # Resident-weights path (the common case).
    ffn = jax.jit(functools.partial(positionwise_feed_forward, tm=512))
    out = jax.block_until_ready(ffn(x, w1, b1, w2, b2))
    ref = reference(x, w1, b1, w2, b2)
    assert out.shape == (B, S, output_depth)
    # bf16 MXU inputs with f32 accumulation -> loosened tolerance vs f32 reference.
    assert jnp.allclose(out, ref, atol=2e-2, rtol=2e-2), "resident path mismatch"

    # Also exercise the F-streaming (accumulator) path used for large d_ff.
    F2 = 256
    w1b = jax.random.normal(k1, (input_depth, F2), dtype=jnp.float32) * 0.05
    b1b = jax.random.normal(k2, (F2,), dtype=jnp.float32) * 0.05
    w2b = jax.random.normal(k3, (F2, output_depth), dtype=jnp.float32) * 0.05
    ffn_s = jax.jit(functools.partial(positionwise_feed_forward, tm=512, tf=128,
                                      force_stream=True))
    out_s = jax.block_until_ready(ffn_s(x, w1b, b1b, w2b, b2))
    ref_s = reference(x, w1b, b1b, w2b, b2)
    assert jnp.allclose(out_s, ref_s, atol=2e-2, rtol=2e-2), "stream path mismatch"

    print("KERNEL_OK")
</pallas_src>

<mosaic_0001>
module attributes {stable_mosaic.version = 11 : i64} {
  func.func @_ffn_kernel(%arg0: i32, %arg1: memref<16x128xf32, #tpu.memory_space<vmem>>, %arg2: memref<128x128xbf16, #tpu.memory_space<vmem>>, %arg3: memref<1x128xf32, #tpu.memory_space<vmem>>, %arg4: memref<128x128xbf16, #tpu.memory_space<vmem>>, %arg5: memref<1x128xf32, #tpu.memory_space<vmem>>, %arg6: memref<16x128xf32, #tpu.memory_space<vmem>>) attributes {dimension_semantics = [#tpu.dimension_semantics<parallel>], iteration_bounds = array<i64: 1>, scalar_prefetch = 0 : i64, scratch_operands = 0 : i64, tpu.core_type = #tpu.core_type<tc>, window_params = [{transform_indices = @transform_0, window_bounds = array<i64: 16, 128>}, {pipeline_mode = #tpu.pipeline_mode<synchronous>, transform_indices = @transform_1, window_bounds = array<i64: 128, 128>}, {pipeline_mode = #tpu.pipeline_mode<synchronous>, transform_indices = @transform_2, window_bounds = array<i64: 1, 128>}, {pipeline_mode = #tpu.pipeline_mode<synchronous>, transform_indices = @transform_3, window_bounds = array<i64: 128, 128>}, {pipeline_mode = #tpu.pipeline_mode<synchronous>, transform_indices = @transform_4, window_bounds = array<i64: 1, 128>}, {transform_indices = @transform_5, window_bounds = array<i64: 16, 128>}]} {
    %c0 = arith.constant 0 : index
    %c0_0 = arith.constant 0 : index
    %0 = vector.load %arg1[%c0, %c0_0] : memref<16x128xf32, #tpu.memory_space<vmem>>, vector<16x128xf32>
    %1 = arith.truncf %0 : vector<16x128xf32> to vector<16x128xbf16>
    %c0_1 = arith.constant 0 : index
    %c0_2 = arith.constant 0 : index
    %2 = vector.load %arg2[%c0_1, %c0_2] : memref<128x128xbf16, #tpu.memory_space<vmem>>, vector<128x128xbf16>
    %cst = arith.constant dense<0.000000e+00> : vector<16x128xf32>
    %3 = tpu.matmul %1, %2, %cst {dimension_numbers = #tpu.dot_dimension_numbers<[1], [0], [0], [1], [0, 0, 1, 1], [], []>} : vector<16x128xbf16>, vector<128x128xbf16>, vector<16x128xf32> -> vector<16x128xf32>
    %c0_3 = arith.constant 0 : index
    %c0_4 = arith.constant 0 : index
    %4 = vector.load %arg3[%c0_3, %c0_4] : memref<1x128xf32, #tpu.memory_space<vmem>>, vector<1x128xf32>
    %5 = vector.broadcast %4 : vector<1x128xf32> to vector<16x128xf32>
    %6 = arith.addf %3, %5 : vector<16x128xf32>
    %cst_5 = arith.constant 0.000000e+00 : f32
    %7 = vector.broadcast %cst_5 : f32 to vector<16x128xf32>
    %8 = arith.maximumf %6, %7 : vector<16x128xf32>
    %9 = arith.truncf %8 : vector<16x128xf32> to vector<16x128xbf16>
    %c0_6 = arith.constant 0 : index
    %c0_7 = arith.constant 0 : index
    %10 = vector.load %arg4[%c0_6, %c0_7] : memref<128x128xbf16, #tpu.memory_space<vmem>>, vector<128x128xbf16>
    %cst_8 = arith.constant dense<0.000000e+00> : vector<16x128xf32>
    %11 = tpu.matmul %9, %10, %cst_8 {dimension_numbers = #tpu.dot_dimension_numbers<[1], [0], [0], [1], [0, 0, 1, 1], [], []>} : vector<16x128xbf16>, vector<128x128xbf16>, vector<16x128xf32> -> vector<16x128xf32>
    %c0_9 = arith.constant 0 : index
    %c0_10 = arith.constant 0 : index
    %12 = vector.load %arg5[%c0_9, %c0_10] : memref<1x128xf32, #tpu.memory_space<vmem>>, vector<1x128xf32>
    %13 = vector.broadcast %12 : vector<1x128xf32> to vector<16x128xf32>
    %14 = arith.addf %11, %13 : vector<16x128xf32>
    %cst_11 = arith.constant 0.000000e+00 : f32
    %15 = vector.broadcast %cst_11 : f32 to vector<16x128xf32>
    %16 = arith.maximumf %14, %15 : vector<16x128xf32>
    %c0_12 = arith.constant 0 : index
    %c0_13 = arith.constant 0 : index
    %17 = vector.load %arg6[%c0_12, %c0_13] : memref<16x128xf32, #tpu.memory_space<vmem>>, vector<16x128xf32>
    tpu.vector_store %arg6[%c0_12, %c0_13], %16 {strides = array<i32>} : memref<16x128xf32, #tpu.memory_space<vmem>>, vector<16x128xf32>,
    return
  }
  func.func @transform_0(%arg0: i32) -> (i32, i32) {
    %c0_i32 = arith.constant 0 : i32
    %c0_i32_0 = arith.constant 0 : i32
    return %arg0, %c0_i32 : i32, i32
  }
  func.func @transform_1(%arg0: i32) -> (i32, i32) {
    %c0_i32 = arith.constant 0 : i32
    %c0_i32_0 = arith.constant 0 : i32
    %c0_i32_1 = arith.constant 0 : i32
    return %c0_i32, %c0_i32_0 : i32, i32
  }
  func.func @transform_2(%arg0: i32) -> (i32, i32) {
    %c0_i32 = arith.constant 0 : i32
    %c0_i32_0 = arith.constant 0 : i32
    %c0_i32_1 = arith.constant 0 : i32
    return %c0_i32, %c0_i32_0 : i32, i32
  }
  func.func @transform_3(%arg0: i32) -> (i32, i32) {
    %c0_i32 = arith.constant 0 : i32
    %c0_i32_0 = arith.constant 0 : i32
    %c0_i32_1 = arith.constant 0 : i32
    return %c0_i32, %c0_i32_0 : i32, i32
  }
  func.func @transform_4(%arg0: i32) -> (i32, i32) {
    %c0_i32 = arith.constant 0 : i32
    %c0_i32_0 = arith.constant 0 : i32
    %c0_i32_1 = arith.constant 0 : i32
    return %c0_i32, %c0_i32_0 : i32, i32
  }
  func.func @transform_5(%arg0: i32) -> (i32, i32) {
    %c0_i32 = arith.constant 0 : i32
    %c0_i32_0 = arith.constant 0 : i32
    return %arg0, %c0_i32 : i32, i32
  }
}

</mosaic_0001>

<llo_original>
// kernel: positionwise_feed_forward.1
$region0: #{positionwise_feed_forward.1}
  #allocation0 [shape = 'u32[]', space=smem, size = 0x4, offset = 0x4, fixed_abs, tag = 'smem constant byte address 0x4 - core index']
  #allocation1 [shape = 'u32[144,128]{1,0:T(1,128)}', space=vmem, size = 0x12000, scoped, tag = 'internal scratch']
  %s0 = inlined_call_operand.vmem [shape: f32[16,128], index: 0, kind: input, shape index: {}]
  %s1 = inlined_call_operand.vmem [shape: bf16[128,128], index: 1, kind: input, shape index: {}]
  %s2 = inlined_call_operand.vmem [shape: f32[1,128], index: 2, kind: input, shape index: {}]
  %s3 = inlined_call_operand.vmem [shape: bf16[128,128], index: 3, kind: input, shape index: {}]
  %s4 = inlined_call_operand.vmem [shape: f32[1,128], index: 4, kind: input, shape index: {}]
  %s5 = inlined_call_operand.vmem [shape: f32[16,128], index: 5, kind: output, shape index: {}]
  %s6 = sld [smem:[#allocation0]]
  $region30: #{positionwise_feed_forward.1} parent=0
    _
  %s8 = ssub.s32 1, %s6
  %s9 = scalar_select 0, %s8, %s6
  // Predicated region
  $region2: #{positionwise_feed_forward.1} parent=0 // pred_check
    _
  $region3: #{positionwise_feed_forward.1} parent=0 // pred_check_branch
    %11 = sbr.rel (0) target = $region5
  $region4: #{positionwise_feed_forward.1} parent=0 // pred_region
    _
  $region5: #{positionwise_feed_forward.1} parent=0 // pred_fallthru
    _
  // Predicated region
  $region6: #{positionwise_feed_forward.1} parent=0 // pred_check
    _
  $region7: #{positionwise_feed_forward.1} parent=0 // pred_check_branch
    %13 = sbr.rel (0) target = $region9
  $region8: #{positionwise_feed_forward.1} parent=0 // pred_region
    _
  $region9: #{positionwise_feed_forward.1} parent=0 // pred_fallthru
    _
  // Predicated region
  $region10: #{positionwise_feed_forward.1} parent=0 // pred_check
    _
  $region11: #{positionwise_feed_forward.1} parent=0 // pred_check_branch
    %15 = sbr.rel (0) target = $region13
  $region12: #{positionwise_feed_forward.1} parent=0 // pred_region
    _
  $region13: #{positionwise_feed_forward.1} parent=0 // pred_fallthru
    _
  // Predicated region
  $region14: #{positionwise_feed_forward.1} parent=0 // pred_check
    _
  $region15: #{positionwise_feed_forward.1} parent=0 // pred_check_branch
    %17 = sbr.rel (0) target = $region17
  $region16: #{positionwise_feed_forward.1} parent=0 // pred_region
    _
  $region17: #{positionwise_feed_forward.1} parent=0 // pred_fallthru
    _
  // Predicated region
  $region18: #{positionwise_feed_forward.1} parent=0 // pred_check
    _
  $region19: #{positionwise_feed_forward.1} parent=0 // pred_check_branch
    %19 = sbr.rel (0) target = $region21
  $region20: #{positionwise_feed_forward.1} parent=0 // pred_region
    _
  $region21: #{positionwise_feed_forward.1} parent=0 // pred_fallthru
    _
  %v21 = vld [vmem:[%s0] sm:$0xff]
  %v22 = vld [vmem:[%s0 + $0x8] sm:$0xff]
  %v23 = vpack.c.bf16 %v22, %v21
  %v24 = vld [vmem:[%s1] sm:$0xf]
  %v25 = vld [vmem:[%s1 + $0x4] sm:$0xf]
  %v26 = vld [vmem:[%s1 + $0x8] sm:$0xf]
  %v27 = vld [vmem:[%s1 + $0xc] sm:$0xf]
  %v28 = vld [vmem:[%s1 + $0x10] sm:$0xf]
  %v29 = vld [vmem:[%s1 + $0x14] sm:$0xf]
  %v30 = vld [vmem:[%s1 + $0x18] sm:$0xf]
  %v31 = vld [vmem:[%s1 + $0x1c] sm:$0xf]
  %v32 = vld [vmem:[%s1 + $0x20] sm:$0xf]
  %v33 = vld [vmem:[%s1 + $0x24] sm:$0xf]
  %v34 = vld [vmem:[%s1 + $0x28] sm:$0xf]
  %v35 = vld [vmem:[%s1 + $0x2c] sm:$0xf]
  %v36 = vld [vmem:[%s1 + $0x30] sm:$0xf]
  %v37 = vld [vmem:[%s1 + $0x34] sm:$0xf]
  %v38 = vld [vmem:[%s1 + $0x38] sm:$0xf]
  %v39 = vld [vmem:[%s1 + $0x3c] sm:$0xf]
  %v40 = vld [vmem:[%s2] sm:$0x1]
  %v42 = vlaneseq
  %v43 = vshrl.u32 %v42, 7
  %v44 = vsub.s32 0, %v43
  %v45 = vrot.slane %v40, %v44
  %v63 = vunpack.c.l.b16 %v24
  %v64 = vunpack.c.l.b16 %v25
  %v65 = vunpack.c.l.b16 %v26
  %v66 = vunpack.c.l.b16 %v27
  %v67 = vunpack.c.l.b16 %v28
  %v68 = vunpack.c.l.b16 %v29
  %v69 = vunpack.c.l.b16 %v30
  %v70 = vunpack.c.l.b16 %v31
  %v71 = vunpack.c.l.b16 %v32
  %v72 = vunpack.c.l.b16 %v33
  %v73 = vunpack.c.l.b16 %v34
  %v74 = vunpack.c.l.b16 %v35
  %v75 = vunpack.c.l.b16 %v36
  %v76 = vunpack.c.l.b16 %v37
  %v77 = vunpack.c.l.b16 %v38
  %v78 = vunpack.c.l.b16 %v39
  %v79 = vpack.c.b16 %v64, %v63
  %v80 = vpack.c.b16 %v66, %v65
  %v81 = vpack.c.b16 %v68, %v67
  %v82 = vpack.c.b16 %v70, %v69
  %v83 = vpack.c.b16 %v72, %v71
  %v84 = vpack.c.b16 %v74, %v73
  %v85 = vpack.c.b16 %v76, %v75
  %v86 = vpack.c.b16 %v78, %v77
  %95 = vmatprep.subr.bf16.mxu0 0
  %96 = vmatpush1.bf16.msra.mxu0 %v86
  %97 = vmatprep.subr.bf16.mxu0 0
  %98 = vmatpush1.bf16.msra.mxu0 %v85
  %99 = vmatprep.subr.bf16.mxu0 0
  %100 = vmatpush1.bf16.msra.mxu0 %v84
  %101 = vmatprep.subr.bf16.mxu0 0
  %102 = vmatpush1.bf16.msra.mxu0 %v83
  %103 = vmatprep.subr.bf16.mxu0 0
  %104 = vmatpush1.bf16.msra.mxu0 %v82
  %105 = vmatprep.subr.bf16.mxu0 0
  %106 = vmatpush1.bf16.msra.mxu0 %v81
  %107 = vmatprep.subr.bf16.mxu0 0
  %108 = vmatpush1.bf16.msra.mxu0 %v80
  %109 = vmatprep.subr.bf16.mxu0 0
  %110 = vmatpush1.bf16.msra.mxu0 %v79
  %111 = vmatprep.subr.bf16.mxu0 0
  %112 = vmatpush2.bf16.msra.mxu0 0
  %113 = vmatprep.subr.bf16.mxu0 0
  %114 = vmatpush2.bf16.msra.mxu0 0
  %115 = vmatprep.subr.bf16.mxu0 0
  %116 = vmatpush2.bf16.msra.mxu0 0
  %117 = vmatprep.subr.bf16.mxu0 0
  %118 = vmatpush2.bf16.msra.mxu0 0
  %119 = vmatprep.subr.bf16.mxu0 0
  %120 = vmatpush2.bf16.msra.mxu0 0
  %121 = vmatprep.subr.bf16.mxu0 0
  %122 = vmatpush2.bf16.msra.mxu0 0
  %123 = vmatprep.subr.bf16.mxu0 0
  %124 = vmatpush2.bf16.msra.mxu0 0
  %125 = vmatprep.subr.bf16.mxu0 0
  %126 = vmatpush2.bf16.msra.mxu0 0
  %127 = vmatprep.mubr.bf16.mxu0 0
  %128 = vmatmul.mubr.bf16.gmra.mxu0 %v23
  %v129 = vpop.f32.mrf.mxu0
  %v130 = vadd.f32 %v45, %v129
  %v131 = vpop.f32.mrf.mxu0
  %v132 = vpop.f32.mrf.mxu0
  %v133 = vadd.f32 %v45, %v132
  %v134 = vpop.f32.mrf.mxu0
  %135 = vdwg.mxu0
  %v136 = vmax.f32 %v130, 0.0
  %v137 = vmax.f32 %v133, 0.0
  %v138 = vpack.c.bf16 %v137, %v136
  %v139 = vld [vmem:[%s3] sm:$0xf]
  %v140 = vld [vmem:[%s3 + $0x4] sm:$0xf]
  %v141 = vld [vmem:[%s3 + $0x8] sm:$0xf]
  %v142 = vld [vmem:[%s3 + $0xc] sm:$0xf]
  %v143 = vld [vmem:[%s3 + $0x10] sm:$0xf]
  %v144 = vld [vmem:[%s3 + $0x14] sm:$0xf]
  %v145 = vld [vmem:[%s3 + $0x18] sm:$0xf]
  %v146 = vld [vmem:[%s3 + $0x1c] sm:$0xf]
  %v147 = vld [vmem:[%s3 + $0x20] sm:$0xf]
  %v148 = vld [vmem:[%s3 + $0x24] sm:$0xf]
  %v149 = vld [vmem:[%s3 + $0x28] sm:$0xf]
  %v150 = vld [vmem:[%s3 + $0x2c] sm:$0xf]
  %v151 = vld [vmem:[%s3 + $0x30] sm:$0xf]
  %v152 = vld [vmem:[%s3 + $0x34] sm:$0xf]
  %v153 = vld [vmem:[%s3 + $0x38] sm:$0xf]
  %v154 = vld [vmem:[%s3 + $0x3c] sm:$0xf]
  %v155 = vld [vmem:[%s4] sm:$0x1]
  %v157 = vlaneseq
  %v158 = vshrl.u32 %v157, 7
  %v159 = vsub.s32 0, %v158
  %v160 = vrot.slane %v155, %v159
  %v178 = vunpack.c.l.b16 %v139
  %v179 = vunpack.c.l.b16 %v140
  %v180 = vunpack.c.l.b16 %v141
  %v181 = vunpack.c.l.b16 %v142
  %v182 = vunpack.c.l.b16 %v143
  %v183 = vunpack.c.l.b16 %v144
  %v184 = vunpack.c.l.b16 %v145
  %v185 = vunpack.c.l.b16 %v146
  %v186 = vunpack.c.l.b16 %v147
  %v187 = vunpack.c.l.b16 %v148
  %v188 = vunpack.c.l.b16 %v149
  %v189 = vunpack.c.l.b16 %v150
  %v190 = vunpack.c.l.b16 %v151
  %v191 = vunpack.c.l.b16 %v152
  %v192 = vunpack.c.l.b16 %v153
  %v193 = vunpack.c.l.b16 %v154
  %v194 = vpack.c.b16 %v179, %v178
  %v195 = vpack.c.b16 %v181, %v180
  %v196 = vpack.c.b16 %v183, %v182
  %v197 = vpack.c.b16 %v185, %v184
  %v198 = vpack.c.b16 %v187, %v186
  %v199 = vpack.c.b16 %v189, %v188
  %v200 = vpack.c.b16 %v191, %v190
  %v201 = vpack.c.b16 %v193, %v192
  %210 = vmatprep.subr.bf16.mxu0 0
  %211 = vmatpush1.bf16.msra.mxu0 %v201
  %212 = vmatprep.subr.bf16.mxu0 0
  %213 = vmatpush1.bf16.msra.mxu0 %v200
  %214 = vmatprep.subr.bf16.mxu0 0
  %215 = vmatpush1.bf16.msra.mxu0 %v199
  %216 = vmatprep.subr.bf16.mxu0 0
  %217 = vmatpush1.bf16.msra.mxu0 %v198
  %218 = vmatprep.subr.bf16.mxu0 0
  %219 = vmatpush1.bf16.msra.mxu0 %v197
  %220 = vmatprep.subr.bf16.mxu0 0
  %221 = vmatpush1.bf16.msra.mxu0 %v196
  %222 = vmatprep.subr.bf16.mxu0 0
  %223 = vmatpush1.bf16.msra.mxu0 %v195
  %224 = vmatprep.subr.bf16.mxu0 0
  %225 = vmatpush1.bf16.msra.mxu0 %v194
  %226 = vmatprep.subr.bf16.mxu0 0
  %227 = vmatpush2.bf16.msra.mxu0 0
  %228 = vmatprep.subr.bf16.mxu0 0
  %229 = vmatpush2.bf16.msra.mxu0 0
  %230 = vmatprep.subr.bf16.mxu0 0
  %231 = vmatpush2.bf16.msra.mxu0 0
  %232 = vmatprep.subr.bf16.mxu0 0
  %233 = vmatpush2.bf16.msra.mxu0 0
  %234 = vmatprep.subr.bf16.mxu0 0
  %235 = vmatpush2.bf16.msra.mxu0 0
  %236 = vmatprep.subr.bf16.mxu0 0
  %237 = vmatpush2.bf16.msra.mxu0 0
  %238 = vmatprep.subr.bf16.mxu0 0
  %239 = vmatpush2.bf16.msra.mxu0 0
  %240 = vmatprep.subr.bf16.mxu0 0
  %241 = vmatpush2.bf16.msra.mxu0 0
  %242 = vmatprep.mubr.bf16.mxu0 0
  %243 = vmatmul.mubr.bf16.gmra.mxu0 %v138
  %v244 = vpop.f32.mrf.mxu0
  %v245 = vadd.f32 %v160, %v244
  %v246 = vpop.f32.mrf.mxu0
  %v247 = vpop.f32.mrf.mxu0
  %v248 = vadd.f32 %v160, %v247
  %v249 = vpop.f32.mrf.mxu0
  %250 = vdwg.mxu0
  %v251 = vmax.f32 %v245, 0.0
  %v252 = vmax.f32 %v248, 0.0
  %253 = vst [vmem:[%s5] sm:$0xff] %v251
  %254 = vst [vmem:[%s5 + $0x8] sm:$0xff] %v252
  // Predicated region
  $region22: #{positionwise_feed_forward.1} parent=0 // pred_check
    _
  $region23: #{positionwise_feed_forward.1} parent=0 // pred_check_branch
    %256 = sbr.rel (0) target = $region25
  $region24: #{positionwise_feed_forward.1} parent=0 // pred_region
    _
  $region25: #{positionwise_feed_forward.1} parent=0 // pred_fallthru
    _
  // Predicated region
  $region26: #{positionwise_feed_forward.1} parent=0 // pred_check
    _
  $region27: #{positionwise_feed_forward.1} parent=0 // pred_check_branch
    %258 = sbr.rel (0) target = $region29
  $region28: #{positionwise_feed_forward.1} parent=0 // pred_region
    _
  $region29: #{positionwise_feed_forward.1} parent=0 // pred_fallthru
    _

</llo_original>
